<compile_context>
chip_gen: v6e
topology: v6e:2x2x1
jax: 0.10.0
libtpu: 0.0.40
codegen_flags: <defaults>
</compile_context>

<pallas_src>
import functools
import math

import jax
import jax.numpy as jnp
from jax.experimental import pallas as pl
from jax.experimental.pallas import tpu as pltpu


# ------------------------------- tile helpers ---------------------------------
def _pick_tile(dim, cap, align):
    """Largest tile <= cap that divides `dim` and is a multiple of `align`.
    Falls back to the full dim (always a legal block shape; may be large for
    awkward dims -- acceptable for the shapes used here)."""
    if dim <= cap:
        return dim
    t = (cap // align) * align
    while t >= align:
        if dim % t == 0:
            return t
        t -= align
    return dim


def _vmem_limit(estimate_bytes):
    """Generation-aware VMEM clamp (v7x has 64 MiB physical vs 128 MiB on v5e/v6e)."""
    try:
        cap = getattr(pltpu.get_tpu_info(), "vmem_capacity_bytes", 128 << 20)
    except Exception:  # pragma: no cover - info query unavailable
        cap = 128 << 20
    hi = min(48 << 20, int(cap * 0.6))
    return int(min(max(estimate_bytes, 8 << 20), hi))


# ----------------------------- projection matmul ------------------------------
def _matmul_kernel(x_ref, w_ref, o_ref, acc_ref):
    @pl.when(pl.program_id(2) == 0)
    def _():
        acc_ref[...] = jnp.zeros(acc_ref.shape, acc_ref.dtype)

    acc_ref[...] += jnp.dot(
        x_ref[...], w_ref[...], preferred_element_type=jnp.float32
    )

    @pl.when(pl.program_id(2) == pl.num_programs(2) - 1)
    def _():
        o_ref[...] = acc_ref[...].astype(o_ref.dtype)


def pallas_matmul(x, w, *, tm_cap=512, tn_cap=256, tk_cap=512):
    """x: (M, K), w: (K, N) -> (M, N). Tiled + pipelined, f32 accumulation.
    Feed bf16 operands for full MXU throughput."""
    M, K = x.shape
    K2, N = w.shape
    assert K == K2
    tm = _pick_tile(M, tm_cap, 8)
    tn = _pick_tile(N, tn_cap, 128)
    tk = _pick_tile(K, tk_cap, 128)
    grid = (M // tm, N // tn, K // tk)

    itm = x.dtype.itemsize
    vmem = (2 * (tm * tk + tk * tn) * itm        # double-buffered inputs
            + 2 * tm * tn * itm                  # output
            + tm * tn * 4                        # f32 accumulator
            + (2 << 20))

    return pl.pallas_call(
        _matmul_kernel,
        out_shape=jax.ShapeDtypeStruct((M, N), x.dtype),
        grid=grid,
        in_specs=[
            pl.BlockSpec((tm, tk), lambda i, j, k: (i, k)),
            pl.BlockSpec((tk, tn), lambda i, j, k: (k, j)),
        ],
        out_specs=pl.BlockSpec((tm, tn), lambda i, j, k: (i, j)),
        scratch_shapes=[pltpu.VMEM((tm, tn), jnp.float32)],
        compiler_params=pltpu.CompilerParams(
            dimension_semantics=("parallel", "parallel", "arbitrary"),
            vmem_limit_bytes=_vmem_limit(vmem),
        ),
    )(x, w)


# ------------------------------- RoPE pre-pass ---------------------------------
def _rope_kernel(x_ref, cos_ref, sin_ref, o_ref, *, H, scale):
    """Rotate one (tt, D) head slab; q heads (h < H) are pre-scaled by 1/sqrt(D)."""
    h = pl.program_id(1)
    x = x_ref[0].astype(jnp.float32)          # RoPE math kept in f32
    D = x.shape[-1]
    r = x * cos_ref[...] + pltpu.roll(x, shift=D // 2, axis=1) * sin_ref[...]
    r = r * jnp.where(h < H, scale, 1.0)      # fold 1/sqrt(D) into q only
    o_ref[0] = r.astype(o_ref.dtype)


def pallas_rope(qkv, cos, sin_signed, n_head, n_embd_per_head, *, tt_cap=512):
    """qkv: (B, T, 3C) laid out [q | k | v]; returns (B, T, 2C) = [RoPE(q)/sqrt(D) | RoPE(k)]."""
    B, T, threeC = qkv.shape
    H, D = n_head, n_embd_per_head
    C = H * D
    assert threeC == 3 * C

    tt = _pick_tile(T, tt_cap, 8)
    grid = (B, 2 * H, T // tt)
    kernel = functools.partial(_rope_kernel, H=H, scale=1.0 / math.sqrt(D))

    vmem = (2 * tt * D * (2 * qkv.dtype.itemsize + 2 * cos.dtype.itemsize)
            + 2 * tt * D * 4 + (2 << 20))

    return pl.pallas_call(
        kernel,
        out_shape=jax.ShapeDtypeStruct((B, T, 2 * C), qkv.dtype),
        grid=grid,
        in_specs=[
            pl.BlockSpec((1, tt, D), lambda b, h, ti: (b, ti, h)),
            pl.BlockSpec((tt, D), lambda b, h, ti: (ti, 0)),
            pl.BlockSpec((tt, D), lambda b, h, ti: (ti, 0)),
        ],
        out_specs=pl.BlockSpec((1, tt, D), lambda b, h, ti: (b, ti, h)),
        compiler_params=pltpu.CompilerParams(
            dimension_semantics=("parallel", "parallel", "parallel"),
            vmem_limit_bytes=_vmem_limit(vmem),
        ),
    )(qkv, cos, sin_signed)


# ----------------------- flash-style causal attention --------------------------
def _flash_attn_kernel(q_ref, k_ref, v_ref, o_ref, m_sc, l_sc, acc_sc, *, tq, tk):
    qi = pl.program_id(2)
    kv = pl.program_id(3)
    # Last kv block containing any causal (unmasked) column for this q block.
    last_kv = (qi * tq + tq - 1) // tk

    @pl.when(kv == 0)
    def _init():
        m_sc[...] = jnp.full(m_sc.shape, -jnp.inf, m_sc.dtype)
        l_sc[...] = jnp.zeros(l_sc.shape, l_sc.dtype)
        acc_sc[...] = jnp.zeros(acc_sc.shape, acc_sc.dtype)

    def scores():
        # q pre-rotated and pre-scaled by 1/sqrt(D); contract last dims (no transpose).
        return jax.lax.dot_general(
            q_ref[0], k_ref[0],
            dimension_numbers=(((1,), (1,)), ((), ())),
            preferred_element_type=jnp.float32)                      # (tq, tk)

    def update(s):
        m_new = jnp.maximum(m_sc[...], jnp.max(s, axis=-1, keepdims=True))
        alpha = jnp.exp(m_sc[...] - m_new)
        p = jnp.exp(s - m_new)
        l_sc[...] = alpha * l_sc[...] + jnp.sum(p, axis=-1, keepdims=True)
        acc_sc[...] = alpha * acc_sc[...] + jnp.dot(
            p.astype(v_ref.dtype), v_ref[0], preferred_element_type=jnp.float32)
        m_sc[...] = m_new

    # Fully-below-diagonal blocks: no mask needed (saves iota/compare/select VALU work).
    below_diag = (kv * tk + tk - 1) <= (qi * tq)

    @pl.when(below_diag)
    def _unmasked():
        update(scores())

    @pl.when(jnp.logical_and(kv <= last_kv, jnp.logical_not(below_diag)))
    def _masked():
        s = scores()
        row = qi * tq + jax.lax.broadcasted_iota(jnp.int32, (tq, tk), 0)
        col = kv * tk + jax.lax.broadcasted_iota(jnp.int32, (tq, tk), 1)
        update(jnp.where(row >= col, s, -jnp.inf))

    @pl.when(kv == last_kv)
    def _finalize():
        inv_l = pl.reciprocal(l_sc[...], approx=True)   # EUP vrcp, free slot
        o_ref[0] = (acc_sc[...] * inv_l).astype(o_ref.dtype)


def pallas_causal_attention(qk_rot, qkv, n_head, n_embd_per_head,
                            *, tq_cap=256, tk_cap=256):
    """qk_rot: (B, T, 2C) pre-rotated [q | k]; qkv: (B, T, 3C) for v.
    Returns (B, T, C) with heads interleaved along the last dim (no transposes)."""
    B, T, threeC = qkv.shape
    H, D = n_head, n_embd_per_head
    C = H * D
    assert threeC == 3 * C and qk_rot.shape == (B, T, 2 * C)

    # 128-aligned tiles keep the (tq, tk) score tile lane-dense and the MXU fed.
    tq = _pick_tile(T, tq_cap, 128)
    tk = _pick_tile(T, tk_cap, 128)
    grid = (B, H, T // tq, T // tk)

    def clamp_kv(qi, kv):
        # Above-diagonal steps reuse the previous block index -> Pallas skips the DMA.
        return jnp.minimum(kv, (qi * tq + tq - 1) // tk)

    q_spec = pl.BlockSpec((1, tq, D), lambda b, h, qi, kv: (b, qi, h))
    k_spec = pl.BlockSpec((1, tk, D), lambda b, h, qi, kv: (b, clamp_kv(qi, kv), H + h))
    v_spec = pl.BlockSpec((1, tk, D), lambda b, h, qi, kv: (b, clamp_kv(qi, kv), 2 * H + h))
    o_spec = pl.BlockSpec((1, tq, D), lambda b, h, qi, kv: (b, qi, h))

    itm = qkv.dtype.itemsize
    vmem = (2 * (tq + 2 * tk) * D * itm          # q/k/v blocks (double-buffered)
            + 2 * tq * D * itm                   # output block
            + (tq * D + 2 * tq) * 4              # m/l/acc scratch
            + 4 * tq * tk * 4                    # score temporaries
            + (2 << 20))

    kernel = functools.partial(_flash_attn_kernel, tq=tq, tk=tk)

    return pl.pallas_call(
        kernel,
        out_shape=jax.ShapeDtypeStruct((B, T, C), qkv.dtype),
        grid=grid,
        in_specs=[q_spec, k_spec, v_spec],
        out_specs=o_spec,
        scratch_shapes=[
            pltpu.VMEM((tq, 1), jnp.float32),   # m (running max)
            pltpu.VMEM((tq, 1), jnp.float32),   # l (running denom)
            pltpu.VMEM((tq, D), jnp.float32),   # acc
        ],
        compiler_params=pltpu.CompilerParams(
            dimension_semantics=("parallel", "parallel", "parallel", "arbitrary"),
            vmem_limit_bytes=_vmem_limit(vmem),
        ),
    )(qk_rot, qk_rot, qkv)


# ------------------------------- full forward ---------------------------------
def rope_cache(T, D, base=10000.0, dtype=jnp.float32):
    """LlamaRotaryEmbedding cache. The rotate_half sign is pre-folded into sin so
    the kernel only needs a lane roll (rotate_half(x) == roll(x, D/2) * sign)."""
    inv_freq = 1.0 / (base ** (jnp.arange(0, D, 2, dtype=jnp.float32) / D))
    t = jnp.arange(T, dtype=jnp.float32)
    freqs = jnp.outer(t, inv_freq)                   # (T, D/2)
    emb = jnp.concatenate([freqs, freqs], axis=-1)   # (T, D)
    sign = jnp.where(jnp.arange(D) < D // 2, -1.0, 1.0)
    return jnp.cos(emb).astype(dtype), (jnp.sin(emb) * sign).astype(dtype)


def causal_self_attention_forward(x, wqkv, wc, cos, sin_signed,
                                  n_head, n_embd_per_head):
    """x: (B, T, C) bf16; wqkv: (C, 3C) = [Wq.T | Wkv.T] bf16; wc: (C, C) = Wc.T bf16.
    cos/sin_signed: (T, D) f32 RoPE tables (precomputed, hoisted out of the forward)."""
    B, T, C = x.shape
    H, D = n_head, n_embd_per_head
    assert C == H * D

    # Fused Q+KV projection: x streamed from HBM once, one wide GEMM.
    qkv = pallas_matmul(x.reshape(B * T, C), wqkv).reshape(B, T, 3 * C)
    # RoPE applied exactly once to Q and K (Q pre-scaled by 1/sqrt(D)).
    qk_rot = pallas_rope(qkv, cos, sin_signed, H, D)                  # (B, T, 2C)
    # Flash-style causal attention over per-head (T, D) slabs (no relayout transposes).
    y = pallas_causal_attention(qk_rot, qkv, H, D)                    # (B, T, C)
    # Output projection.
    y = pallas_matmul(y.reshape(B * T, C), wc)
    return y.reshape(B, T, C)


# ------------------------------ pure-JAX reference -----------------------------
def _reference_forward(x, wq, wkv, wc, n_head, n_embd_per_head):
    B, T, C = x.shape
    H, D = n_head, n_embd_per_head
    q = jnp.einsum("btc,cn->btn", x, wq, precision="highest")
    kv = jnp.einsum("btc,cn->btn", x, wkv, precision="highest")
    k, v = kv[..., :C], kv[..., C:]
    sh = lambda t: t.reshape(B, T, H, D).transpose(0, 2, 1, 3)
    q, k, v = sh(q), sh(k), sh(v)

    inv_freq = 1.0 / (10000.0 ** (jnp.arange(0, D, 2, dtype=jnp.float32) / D))
    t = jnp.arange(T, dtype=jnp.float32)
    emb = jnp.concatenate([jnp.outer(t, inv_freq)] * 2, axis=-1)
    cos, sin = jnp.cos(emb), jnp.sin(emb)
    rot = lambda u: jnp.concatenate([-u[..., D // 2:], u[..., :D // 2]], axis=-1)
    q = q * cos + rot(q) * sin
    k = k * cos + rot(k) * sin

    s = jnp.einsum("bhqd,bhkd->bhqk", q, k, precision="highest") / math.sqrt(D)
    mask = jnp.tril(jnp.ones((T, T), bool))
    s = jnp.where(mask, s, -jnp.inf)
    p = jax.nn.softmax(s, axis=-1)
    y = jnp.einsum("bhqk,bhkd->bhqd", p, v, precision="highest")
    y = y.transpose(0, 2, 1, 3).reshape(B * T, C)
    return jnp.einsum("tc,cn->tn", y, wc, precision="highest").reshape(B, T, C)


# ------------------------------------ main -------------------------------------
if __name__ == "__main__":
    # Small config consistent with the module: n_head * n_embd_per_head = C
    B, T = 2, 8
    n_head, n_embd_per_head = 2, 128
    C = n_head * n_embd_per_head  # 256

    key = jax.random.PRNGKey(0)
    kx, kq, kkv, kc = jax.random.split(key, 4)
    w_scale = 1.0 / math.sqrt(C)
    x = jax.random.normal(kx, (B, T, C), jnp.float32)
    wq = jax.random.normal(kq, (C, C), jnp.float32) * w_scale
    wkv = jax.random.normal(kkv, (C, 2 * C), jnp.float32) * w_scale
    wc = jax.random.normal(kc, (C, C), jnp.float32) * w_scale

    # Hoisted to init time: fused weight concat, bf16 MXU operand casts, RoPE cache.
    x_bf = x.astype(jnp.bfloat16)
    wqkv_bf = jnp.concatenate([wq, wkv], axis=1).astype(jnp.bfloat16)   # (C, 3C)
    wc_bf = wc.astype(jnp.bfloat16)
    cos, sin_signed = rope_cache(T, n_embd_per_head)                    # f32 tables

    y = causal_self_attention_forward(x_bf, wqkv_bf, wc_bf, cos, sin_signed,
                                      n_head, n_embd_per_head)
    y = jax.block_until_ready(y)
    assert y.shape == (B, T, C)

    # f32 reference on the same bf16-rounded inputs; tolerance reflects bf16 MXU operands.
    y_ref = _reference_forward(
        x_bf.astype(jnp.float32),
        wqkv_bf[:, :C].astype(jnp.float32),
        wqkv_bf[:, C:].astype(jnp.float32),
        wc_bf.astype(jnp.float32),
        n_head, n_embd_per_head)
    y_f32 = y.astype(jnp.float32)
    max_err = float(jnp.max(jnp.abs(y_f32 - y_ref)))
    assert jnp.allclose(y_f32, y_ref, rtol=5e-2, atol=5e-2), \
        f"mismatch vs reference (max abs err {max_err})"

    print("KERNEL_OK")
</pallas_src>

<mosaic_0001>
module attributes {stable_mosaic.version = 11 : i64} {
  func.func @_matmul_kernel(%arg0: i32, %arg1: i32, %arg2: i32, %arg3: memref<16x256xbf16, #tpu.memory_space<vmem>>, %arg4: memref<256x256xbf16, #tpu.memory_space<vmem>>, %arg5: memref<16x256xbf16, #tpu.memory_space<vmem>>, %arg6: memref<16x256xf32, #tpu.memory_space<vmem>>) attributes {dimension_semantics = [#tpu.dimension_semantics<parallel>, #tpu.dimension_semantics<parallel>, #tpu.dimension_semantics<arbitrary>], iteration_bounds = array<i64: 1, 3, 1>, scalar_prefetch = 0 : i64, scratch_operands = 1 : i64, tpu.core_type = #tpu.core_type<tc>, window_params = [{transform_indices = @transform_0, window_bounds = array<i64: 16, 256>}, {transform_indices = @transform_1, window_bounds = array<i64: 256, 256>}, {transform_indices = @transform_2, window_bounds = array<i64: 16, 256>}]} {
    %c0_i32 = arith.constant 0 : i32
    %0 = arith.cmpi eq, %arg2, %c0_i32 : i32
    %1 = arith.extui %0 : i1 to i32
    %c0_i32_0 = arith.constant 0 : i32
    %2 = arith.cmpi ne, %1, %c0_i32_0 : i32
    scf.if %2 {
      %cst_10 = arith.constant 0.000000e+00 : f32
      %12 = vector.broadcast %cst_10 : f32 to vector<16x256xf32>
      %c0_11 = arith.constant 0 : index
      %c0_12 = arith.constant 0 : index
      %13 = vector.load %arg6[%c0_11, %c0_12] : memref<16x256xf32, #tpu.memory_space<vmem>>, vector<16x256xf32>
      tpu.vector_store %arg6[%c0_11, %c0_12], %12 {strides = array<i32>} : memref<16x256xf32, #tpu.memory_space<vmem>>, vector<16x256xf32>,
    } else {
    }
    %c0 = arith.constant 0 : index
    %c0_1 = arith.constant 0 : index
    %3 = vector.load %arg6[%c0, %c0_1] : memref<16x256xf32, #tpu.memory_space<vmem>>, vector<16x256xf32>
    %c0_2 = arith.constant 0 : index
    %c0_3 = arith.constant 0 : index
    %4 = vector.load %arg3[%c0_2, %c0_3] : memref<16x256xbf16, #tpu.memory_space<vmem>>, vector<16x256xbf16>
    %c0_4 = arith.constant 0 : index
    %c0_5 = arith.constant 0 : index
    %5 = vector.load %arg4[%c0_4, %c0_5] : memref<256x256xbf16, #tpu.memory_space<vmem>>, vector<256x256xbf16>
    %cst = arith.constant dense<0.000000e+00> : vector<16x256xf32>
    %6 = tpu.matmul %4, %5, %cst {dimension_numbers = #tpu.dot_dimension_numbers<[1], [0], [0], [1], [0, 0, 1, 1], [], []>} : vector<16x256xbf16>, vector<256x256xbf16>, vector<16x256xf32> -> vector<16x256xf32>
    %7 = arith.addf %3, %6 : vector<16x256xf32>
    %c0_6 = arith.constant 0 : index
    %c0_7 = arith.constant 0 : index
    %8 = vector.load %arg6[%c0_6, %c0_7] : memref<16x256xf32, #tpu.memory_space<vmem>>, vector<16x256xf32>
    tpu.vector_store %arg6[%c0_6, %c0_7], %7 {strides = array<i32>} : memref<16x256xf32, #tpu.memory_space<vmem>>, vector<16x256xf32>,
    %c0_i32_8 = arith.constant 0 : i32
    %9 = arith.cmpi eq, %arg2, %c0_i32_8 : i32
    %10 = arith.extui %9 : i1 to i32
    %c0_i32_9 = arith.constant 0 : i32
    %11 = arith.cmpi ne, %10, %c0_i32_9 : i32
    scf.if %11 {
      %c0_10 = arith.constant 0 : index
      %c0_11 = arith.constant 0 : index
      %12 = vector.load %arg6[%c0_10, %c0_11] : memref<16x256xf32, #tpu.memory_space<vmem>>, vector<16x256xf32>
      %13 = arith.truncf %12 : vector<16x256xf32> to vector<16x256xbf16>
      %c0_12 = arith.constant 0 : index
      %c0_13 = arith.constant 0 : index
      %14 = vector.load %arg5[%c0_12, %c0_13] : memref<16x256xbf16, #tpu.memory_space<vmem>>, vector<16x256xbf16>
      tpu.vector_store %arg5[%c0_12, %c0_13], %13 {strides = array<i32>} : memref<16x256xbf16, #tpu.memory_space<vmem>>, vector<16x256xbf16>,
    } else {
    }
    return
  }
  func.func @transform_0(%arg0: i32, %arg1: i32, %arg2: i32) -> (i32, i32) {
    %c0_i32 = arith.constant 0 : i32
    return %arg0, %arg2 : i32, i32
  }
  func.func @transform_1(%arg0: i32, %arg1: i32, %arg2: i32) -> (i32, i32) {
    %c0_i32 = arith.constant 0 : i32
    return %arg2, %arg1 : i32, i32
  }
  func.func @transform_2(%arg0: i32, %arg1: i32, %arg2: i32) -> (i32, i32) {
    %c0_i32 = arith.constant 0 : i32
    return %arg0, %arg1 : i32, i32
  }
}

</mosaic_0001>

<llo_original>
// kernel: tpu_custom_call.1
$region0: #{tpu_custom_call.1}
  #allocation0 [shape = 'u32[]', space=smem, size = 0x4, offset = 0x4, fixed_abs, tag = 'smem constant byte address 0x4 - core index']
  #allocation1 [shape = 'u32[144,128]{1,0:T(1,128)}', space=vmem, size = 0x12000, scoped, tag = 'internal scratch']
  #allocation2 [shape = 'f32[16,256]{1,0:T(8,128)}', space=vmem, size = 0x4000, scoped, tag = 'scratch operand']
  %s0 = inlined_call_operand.hbm [shape: bf16[16,256], index: 0, kind: input, shape index: {}]
  %s1 = inlined_call_operand.hbm [shape: bf16[256,768], index: 1, kind: input, shape index: {}]
  %s2 = inlined_call_operand.hbm [shape: bf16[16,768], index: 2, kind: output, shape index: {}]
  %s3 = sld [smem:[#allocation0]]
  $region57: #{tpu_custom_call.1} parent=0
    _
  %s5 = ssub.s32 1, %s3
  %s6 = scalar_select 0, %s5, %s3
  $region1: #{tpu_custom_call.1} parent=0
    #allocation3 [shape = 'u8[8192]{0}', space=vmem, size = 0x2000, scoped, tag = 'input window, operand 0, single buffered']
    #allocation4 [shape = 's32[2]{0}', space=sflag, size = 0x8, scoped, tag = 'scoped memory for tpu_custom_call.1']
    #allocation5 [shape = 's32[2]{0}', space=sflag, size = 0x8, scoped, tag = 'scoped memory for tpu_custom_call.1']
    #allocation6 [shape = 'u8[262144]{0}', space=vmem, size = 0x40000, scoped, tag = 'input window, operand 1']
    #allocation7 [shape = 's32[2]{0}', space=sflag, size = 0x8, scoped, tag = 'scoped memory for tpu_custom_call.1']
    #allocation8 [shape = 'u8[16384]{0}', space=vmem, size = 0x4000, scoped, tag = 'output window, operand 0']
    %7 = vsyncpa [#allocation4], 0
    %8 = vsyncpa [#allocation7], 0
    %s9 = scalar_lea.sflag [#allocation7], 1
    %10 = vsyncpa %s9, 0
    %11 = vsyncpa [#allocation5], 0
    %s12 = scalar_lea.sflag [#allocation5], 1
    %13 = vsyncpa %s12, 0
    loop: start=0, step=1, limit=5
    $region2: #{tpu_custom_call.1} parent=1 // loop_pre_header
      _
    $region3: #{tpu_custom_call.1} parent=1 // loop_header
      %s15 = sphi 0, %s19
      %p16 = scmp.ge.s32.totalorder %s15, 5
      %s22 = sphi 0, %s41
      %s23 = sphi 0, %s37
      %s24 = sphi 0, %s33
      %s25 = sphi 0, %s22
      %s26 = sphi 0, %s23
      %s27 = sphi 0, %s24
      %s28 = sphi 0, %s25
      %s29 = sphi 0, %s26
      %s30 = sphi 0, %s27
      %s46 = sphi 0, %s48
      %s49 = sphi 0, %s46
      %s50 = sphi 0, %s49
      %s66 = sphi 0, %s50
      %s74 = sphi 0, %s76
      %s77 = sphi 0, %s74
      %s78 = sphi 0, %s77
      %s94 = sphi 0, %s78
      %s102 = sphi 0, %s104
      %s105 = sphi 0, %s102
      %s106 = sphi 0, %s105
      %s122 = sphi 0, %s106
    $region4: #{tpu_custom_call.1} parent=1 // loop_header_branch
      %18 = sbr.rel (%p16) target = $region8
    $region5: #{tpu_custom_call.1} parent=1 // loop_body
      %s20 = ssub.s32 %s15, 1
      %s21 = ssub.s32 %s15, 2
      %s31 = sadd.s32 1, %s24
      %p32 = scmp.ge.s32.totalorder %s31, 1
      %s33 = scalar_select %p32, 0, %s31
      %s34 = sadd.s32 1, %s23
      %s35 = scalar_select %p32, %s34, %s23
      %p36 = scmp.ge.s32.totalorder %s35, 3
      %s37 = scalar_select %p36, 0, %s35
      %s38 = sadd.s32 1, %s22
      %s39 = scalar_select %p36, %s38, %s22
      %p40 = scmp.ge.s32.totalorder %s39, 1
      %s41 = scalar_select %p40, 0, %s39
      %s42 = ssub.s32 %s22, %s41
      %s43 = ssub.s32 %s24, %s33
      %s44 = sor.u32 %s42, %s43
      %p45 = scmp.eq.s32.totalorder %s44, 0
      %s47 = sadd.s32 %s46, 1
      %s48 = scalar_select %p45, %s46, %s47
      %p51 = pneg %p45
      %p52 = scmp.eq.s32.totalorder %s15, 2
      %p53 = por %p51, %p52
      %p54 = scmp.ne.s32.totalorder %s46, %s49
      %p55 = scmp.eq.s32.totalorder %s15, 0
      %p56 = por %p54, %p55
      %p57 = scmp.ne.s32.totalorder %s46, %s49
      %p58 = scmp.eq.s32.totalorder %s20, 2
      %p59 = por %p57, %p58
      %p60 = scmp.ne.s32.totalorder %s49, %s50
      %p61 = scmp.eq.s32.totalorder %s20, 0
      %p62 = por %p60, %p61
      %p63 = scmp.ne.s32.totalorder %s49, %s50
      %p64 = scmp.eq.s32.totalorder %s21, 2
      %p65 = por %p63, %p64
      %p67 = scmp.ne.s32.totalorder %s50, %s66
      %p68 = scmp.eq.s32.totalorder %s21, 0
      %p69 = por %p67, %p68
      %s70 = ssub.s32 %s24, %s33
      %s71 = ssub.s32 %s23, %s37
      %s72 = sor.u32 %s70, %s71
      %p73 = scmp.eq.s32.totalorder %s72, 0
      %s75 = sadd.s32 %s74, 1
      %s76 = scalar_select %p73, %s74, %s75
      %p79 = pneg %p73
      %p80 = scmp.eq.s32.totalorder %s15, 2
      %p81 = por %p79, %p80
      %p82 = scmp.ne.s32.totalorder %s74, %s77
      %p83 = scmp.eq.s32.totalorder %s15, 0
      %p84 = por %p82, %p83
      %p85 = scmp.ne.s32.totalorder %s74, %s77
      %p86 = scmp.eq.s32.totalorder %s20, 2
      %p87 = por %p85, %p86
      %p88 = scmp.ne.s32.totalorder %s77, %s78
      %p89 = scmp.eq.s32.totalorder %s20, 0
      %p90 = por %p88, %p89
      %p91 = scmp.ne.s32.totalorder %s77, %s78
      %p92 = scmp.eq.s32.totalorder %s21, 2
      %p93 = por %p91, %p92
      %p95 = scmp.ne.s32.totalorder %s78, %s94
      %p96 = scmp.eq.s32.totalorder %s21, 0
      %p97 = por %p95, %p96
      %s98 = ssub.s32 %s22, %s41
      %s99 = ssub.s32 %s23, %s37
      %s100 = sor.u32 %s98, %s99
      %p101 = scmp.eq.s32.totalorder %s100, 0
      %s103 = sadd.s32 %s102, 1
      %s104 = scalar_select %p101, %s102, %s103
      %p107 = pneg %p101
      %p108 = scmp.eq.s32.totalorder %s15, 2
      %p109 = por %p107, %p108
      %p110 = scmp.ne.s32.totalorder %s102, %s105
      %p111 = scmp.eq.s32.totalorder %s15, 0
      %p112 = por %p110, %p111
      %p113 = scmp.ne.s32.totalorder %s102, %s105
      %p114 = scmp.eq.s32.totalorder %s20, 2
      %p115 = por %p113, %p114
      %p116 = scmp.ne.s32.totalorder %s105, %s106
      %p117 = scmp.eq.s32.totalorder %s20, 0
      %p118 = por %p116, %p117
      %p119 = scmp.ne.s32.totalorder %s105, %s106
      %p120 = scmp.eq.s32.totalorder %s21, 2
      %p121 = por %p119, %p120
      %p123 = scmp.ne.s32.totalorder %s106, %s122
      %p124 = scmp.eq.s32.totalorder %s21, 0
      %p125 = por %p123, %p124
      %p126 = scmp.le.s32.totalorder 1, %s15
      %p127 = scmp.lt.s32.totalorder %s15, 4
      %p128 = pnand %p126, %p127
      %p129 = pneg %p128
      // Predicated region
      $region9: #{tpu_custom_call.1} parent=5 // pred_check
        _
      $region10: #{tpu_custom_call.1} parent=5 // pred_check_branch
        %131 = sbr.rel (%p128) target = $region12
      $region11: #{tpu_custom_call.1} parent=5 // pred_region
        %s132 = ssub.s32 %s15, 1
        // Predicated region
        $region13: #{tpu_custom_call.1} parent=11 // pred_check
          %p133 = pneg %p62
        $region14: #{tpu_custom_call.1} parent=11 // pred_check_branch
          %135 = sbr.rel (%p133) target = $region16
        $region15: #{tpu_custom_call.1} parent=11 // pred_region
          %s136 = smul.u32 2, %s25
          %s137 = smul.u32 2, %s27
          %s139 = ssub.s32 256, 256
          %140 = vsyncadd [#allocation4], %s139
          %s141 = smul.addr %s136, 2
          %s142 = sadd.s32 %s137, %s141
          %s143 = smul.addr %s142, 64
          %s144 = scalar_lea.hbm %s0, %s143
          %s145 = sshll.u32 [#allocation3], 4
          %s146 = int_to_ptr.vmem [resolvable:$true] %s145
          %151 = dma.hbm_to_vmem [thread:$0]  %s144, 256, %s146, [#allocation4], 128, 128, 8
        $region16: #{tpu_custom_call.1} parent=11 // pred_fallthru
          _
      $region12: #{tpu_custom_call.1} parent=5 // pred_fallthru
        _
      %p152 = scmp.lt.s32.totalorder %s15, 3
      // Predicated region
      $region17: #{tpu_custom_call.1} parent=5 // pred_check
        %p153 = pneg %p152
      $region18: #{tpu_custom_call.1} parent=5 // pred_check_branch
        %155 = sbr.rel (%p153) target = $region20
      $region19: #{tpu_custom_call.1} parent=5 // pred_region
        // Predicated region
        $region21: #{tpu_custom_call.1} parent=19 // pred_check
          %p156 = pneg %p84
        $region22: #{tpu_custom_call.1} parent=19 // pred_check_branch
          %158 = sbr.rel (%p156) target = $region24
        $region23: #{tpu_custom_call.1} parent=19 // pred_region
          %s159 = sand.u32 %s74, 1
          %s160 = scalar_lea.sflag [#allocation7], %s159
          %s161 = sand.u32 %s74, 1
          %s162 = smul.addr %s161, 256
          %s163 = scalar_lea.vmem [#allocation6], %s162
          %s164 = smul.u32 32, %s24
          %s165 = smul.u32 2, %s23
          %s167 = ssub.s32 4096, 4096
          %168 = vsyncadd %s160, %s167
          %s169 = smul.addr %s164, 6
          %s170 = sadd.s32 %s165, %s169
          %s171 = smul.addr %s170, 64
          %s172 = scalar_lea.hbm %s1, %s171
          %s173 = sshll.u32 %s163, 4
          %s174 = int_to_ptr.vmem [resolvable:$true] %s173
          %179 = dma.hbm_to_vmem [thread:$0]  %s172, 4096, %s174, %s160, 384, 128, 8
        $region24: #{tpu_custom_call.1} parent=19 // pred_fallthru
          _
      $region20: #{tpu_custom_call.1} parent=5 // pred_fallthru
        _
      %p180 = scmp.le.s32.totalorder 1, %s15
      %p181 = scmp.lt.s32.totalorder %s15, 4
      %p182 = pnand %p180, %p181
      %p183 = pneg %p182
      // Predicated region
      $region25: #{tpu_custom_call.1} parent=5 // pred_check
        _
      $region26: #{tpu_custom_call.1} parent=5 // pred_check_branch
        %185 = sbr.rel (%p182) target = $region28
      $region27: #{tpu_custom_call.1} parent=5 // pred_region
        %s186 = ssub.s32 %s15, 1
        // Predicated region
        $region29: #{tpu_custom_call.1} parent=27 // pred_check
          %p187 = pneg %p62
        $region30: #{tpu_custom_call.1} parent=27 // pred_check_branch
          %189 = sbr.rel (%p187) target = $region32
        $region31: #{tpu_custom_call.1} parent=27 // pred_region
          %190 = dma.done [#allocation4], 256
        $region32: #{tpu_custom_call.1} parent=27 // pred_fallthru
          _
        %s191 = sand.u32 %s77, 1
        %s192 = scalar_lea.sflag [#allocation7], %s191
        %s193 = sand.u32 %s77, 1
        %s194 = smul.addr %s193, 256
        %s195 = scalar_lea.vmem [#allocation6], %s194
        // Predicated region
        $region33: #{tpu_custom_call.1} parent=27 // pred_check
          %p196 = pneg %p90
        $region34: #{tpu_custom_call.1} parent=27 // pred_check_branch
          %198 = sbr.rel (%p196) target = $region36
        $region35: #{tpu_custom_call.1} parent=27 // pred_region
          %199 = dma.done %s192, 4096
        $region36: #{tpu_custom_call.1} parent=27 // pred_fallthru
          _
        %p200 = pneg %p62
        %p201 = pneg %p59
        %s202 = sand.u32 %s77, 1
        %s203 = scalar_lea.sflag [#allocation7], %s202
        %s204 = sand.u32 %s77, 1
        %s205 = smul.addr %s204, 256
        %s206 = scalar_lea.vmem [#allocation6], %s205
        %p207 = pneg %p90
        %p208 = pneg %p87
        %p209 = pneg %p118
        %p210 = pneg %p115
        %s211 = sand.u32 %s105, 1
        %s212 = scalar_lea.sflag [#allocation5], %s211
        %s213 = sand.u32 %s105, 1
        %s214 = smul.addr %s213, 16
        %s215 = scalar_lea.vmem [#allocation8], %s214
        %s216 = smul.u32 2, %s25
        %s217 = smul.u32 2, %s27
        %s218 = smul.u32 32, %s27
        %s219 = smul.u32 2, %s26
        %s220 = smul.u32 2, %s25
        %s221 = smul.u32 2, %s26
        %p222 = scmp.eq.s32.totalorder %s27, 0
        // Predicated region
        $region37: #{tpu_custom_call.1} parent=27 // pred_check
          %p223 = pneg %p222
        $region38: #{tpu_custom_call.1} parent=27 // pred_check_branch
          %225 = sbr.rel (%p223) target = $region40
        $region39: #{tpu_custom_call.1} parent=27 // pred_region
          %226 = vst [vmem:[#allocation2] sm:$0xff] 0.0
          %227 = vst [vmem:[#allocation2 + $0x8] sm:$0xff] 0.0
          %228 = vst [vmem:[#allocation2 + $0x10] sm:$0xff] 0.0
          %229 = vst [vmem:[#allocation2 + $0x18] sm:$0xff] 0.0
        $region40: #{tpu_custom_call.1} parent=27 // pred_fallthru
          _
        %v230 = vld [vmem:[#allocation2] sm:$0xff]
        %v231 = vld [vmem:[#allocation2 + $0x8] sm:$0xff]
        %v232 = vld [vmem:[#allocation2 + $0x10] sm:$0xff]
        %v233 = vld [vmem:[#allocation2 + $0x18] sm:$0xff]
        %v234 = vld [vmem:[#allocation3] sm:$0xff]
        %v235 = vld [vmem:[#allocation3 + $0x8] sm:$0xff]
        %v236 = vld [vmem:[%s195] sm:$0xff]
        %v237 = vld [vmem:[%s195 + $0x8] sm:$0xff]
        %v238 = vld [vmem:[%s195 + $0x10] sm:$0xff]
        %v239 = vld [vmem:[%s195 + $0x18] sm:$0xff]
        %v240 = vld [vmem:[%s195 + $0x20] sm:$0xff]
        %v241 = vld [vmem:[%s195 + $0x28] sm:$0xff]
        %v242 = vld [vmem:[%s195 + $0x30] sm:$0xff]
        %v243 = vld [vmem:[%s195 + $0x38] sm:$0xff]
        %v244 = vld [vmem:[%s195 + $0x40] sm:$0xff]
        %v245 = vld [vmem:[%s195 + $0x48] sm:$0xff]
        %v246 = vld [vmem:[%s195 + $0x50] sm:$0xff]
        %v247 = vld [vmem:[%s195 + $0x58] sm:$0xff]
        %v248 = vld [vmem:[%s195 + $0x60] sm:$0xff]
        %v249 = vld [vmem:[%s195 + $0x68] sm:$0xff]
        %v250 = vld [vmem:[%s195 + $0x70] sm:$0xff]
        %v251 = vld [vmem:[%s195 + $0x78] sm:$0xff]
        %v252 = vld [vmem:[%s195 + $0x80] sm:$0xff]
        %v253 = vld [vmem:[%s195 + $0x88] sm:$0xff]
        %v254 = vld [vmem:[%s195 + $0x90] sm:$0xff]
        %v255 = vld [vmem:[%s195 + $0x98] sm:$0xff]
        %v256 = vld [vmem:[%s195 + $0xa0] sm:$0xff]
        %v257 = vld [vmem:[%s195 + $0xa8] sm:$0xff]
        %v258 = vld [vmem:[%s195 + $0xb0] sm:$0xff]
        %v259 = vld [vmem:[%s195 + $0xb8] sm:$0xff]
        %v260 = vld [vmem:[%s195 + $0xc0] sm:$0xff]
        %v261 = vld [vmem:[%s195 + $0xc8] sm:$0xff]
        %v262 = vld [vmem:[%s195 + $0xd0] sm:$0xff]
        %v263 = vld [vmem:[%s195 + $0xd8] sm:$0xff]
        %v264 = vld [vmem:[%s195 + $0xe0] sm:$0xff]
        %v265 = vld [vmem:[%s195 + $0xe8] sm:$0xff]
        %v266 = vld [vmem:[%s195 + $0xf0] sm:$0xff]
        %v267 = vld [vmem:[%s195 + $0xf8] sm:$0xff]
        %v270 = vunpack.c.l.b16 %v234
        %v271 = vunpack.c.h.b16 %v234
        %v272 = vunpack.c.l.b16 %v235
        %v273 = vunpack.c.h.b16 %v235
        %v274 = vpack.c.b16 %v272, %v270
        %v275 = vpack.c.b16 %v273, %v271
        %v310 = vunpack.c.l.b16 %v236
        %v311 = vunpack.c.h.b16 %v236
        %v312 = vunpack.c.l.b16 %v237
        %v313 = vunpack.c.h.b16 %v237
        %v314 = vunpack.c.l.b16 %v238
        %v315 = vunpack.c.h.b16 %v238
        %v316 = vunpack.c.l.b16 %v239
        %v317 = vunpack.c.h.b16 %v239
        %v318 = vunpack.c.l.b16 %v240
        %v319 = vunpack.c.h.b16 %v240
        %v320 = vunpack.c.l.b16 %v241
        %v321 = vunpack.c.h.b16 %v241
        %v322 = vunpack.c.l.b16 %v242
        %v323 = vunpack.c.h.b16 %v242
        %v324 = vunpack.c.l.b16 %v243
        %v325 = vunpack.c.h.b16 %v243
        %v326 = vunpack.c.l.b16 %v244
        %v327 = vunpack.c.h.b16 %v244
        %v328 = vunpack.c.l.b16 %v245
        %v329 = vunpack.c.h.b16 %v245
        %v330 = vunpack.c.l.b16 %v246
        %v331 = vunpack.c.h.b16 %v246
        %v332 = vunpack.c.l.b16 %v247
        %v333 = vunpack.c.h.b16 %v247
        %v334 = vunpack.c.l.b16 %v248
        %v335 = vunpack.c.h.b16 %v248
        %v336 = vunpack.c.l.b16 %v249
        %v337 = vunpack.c.h.b16 %v249
        %v338 = vunpack.c.l.b16 %v250
        %v339 = vunpack.c.h.b16 %v250
        %v340 = vunpack.c.l.b16 %v251
        %v341 = vunpack.c.h.b16 %v251
        %v342 = vunpack.c.l.b16 %v252
        %v343 = vunpack.c.h.b16 %v252
        %v344 = vunpack.c.l.b16 %v253
        %v345 = vunpack.c.h.b16 %v253
        %v346 = vunpack.c.l.b16 %v254
        %v347 = vunpack.c.h.b16 %v254
        %v348 = vunpack.c.l.b16 %v255
        %v349 = vunpack.c.h.b16 %v255
        %v350 = vunpack.c.l.b16 %v256
        %v351 = vunpack.c.h.b16 %v256
        %v352 = vunpack.c.l.b16 %v257
        %v353 = vunpack.c.h.b16 %v257
        %v354 = vunpack.c.l.b16 %v258
        %v355 = vunpack.c.h.b16 %v258
        %v356 = vunpack.c.l.b16 %v259
        %v357 = vunpack.c.h.b16 %v259
        %v358 = vunpack.c.l.b16 %v260
        %v359 = vunpack.c.h.b16 %v260
        %v360 = vunpack.c.l.b16 %v261
        %v361 = vunpack.c.h.b16 %v261
        %v362 = vunpack.c.l.b16 %v262
        %v363 = vunpack.c.h.b16 %v262
        %v364 = vunpack.c.l.b16 %v263
        %v365 = vunpack.c.h.b16 %v263
        %v366 = vunpack.c.l.b16 %v264
        %v367 = vunpack.c.h.b16 %v264
        %v368 = vunpack.c.l.b16 %v265
        %v369 = vunpack.c.h.b16 %v265
        %v370 = vunpack.c.l.b16 %v266
        %v371 = vunpack.c.h.b16 %v266
        %v372 = vunpack.c.l.b16 %v267
        %v373 = vunpack.c.h.b16 %v267
        %v374 = vpack.c.b16 %v312, %v310
        %v375 = vpack.c.b16 %v313, %v311
        %v376 = vpack.c.b16 %v316, %v314
        %v377 = vpack.c.b16 %v317, %v315
        %v378 = vpack.c.b16 %v320, %v318
        %v379 = vpack.c.b16 %v321, %v319
        %v380 = vpack.c.b16 %v324, %v322
        %v381 = vpack.c.b16 %v325, %v323
        %v382 = vpack.c.b16 %v328, %v326
        %v383 = vpack.c.b16 %v329, %v327
        %v384 = vpack.c.b16 %v332, %v330
        %v385 = vpack.c.b16 %v333, %v331
        %v386 = vpack.c.b16 %v336, %v334
        %v387 = vpack.c.b16 %v337, %v335
        %v388 = vpack.c.b16 %v340, %v338
        %v389 = vpack.c.b16 %v341, %v339
        %v390 = vpack.c.b16 %v344, %v342
        %v391 = vpack.c.b16 %v345, %v343
        %v392 = vpack.c.b16 %v348, %v346
        %v393 = vpack.c.b16 %v349, %v347
        %v394 = vpack.c.b16 %v352, %v350
        %v395 = vpack.c.b16 %v353, %v351
        %v396 = vpack.c.b16 %v356, %v354
        %v397 = vpack.c.b16 %v357, %v355
        %v398 = vpack.c.b16 %v360, %v358
        %v399 = vpack.c.b16 %v361, %v359
        %v400 = vpack.c.b16 %v364, %v362
        %v401 = vpack.c.b16 %v365, %v363
        %v402 = vpack.c.b16 %v368, %v366
        %v403 = vpack.c.b16 %v369, %v367
        %v404 = vpack.c.b16 %v372, %v370
        %v405 = vpack.c.b16 %v373, %v371
        %438 = vmatprep.subr.bf16.mxu0 %v389
        %439 = vmatpush1.bf16.msra.mxu0 %v388
        %440 = vmatprep.subr.bf16.mxu0 %v387
        %441 = vmatpush1.bf16.msra.mxu0 %v386
        %442 = vmatprep.subr.bf16.mxu0 %v385
        %443 = vmatpush1.bf16.msra.mxu0 %v384
        %444 = vmatprep.subr.bf16.mxu0 %v383
        %445 = vmatpush1.bf16.msra.mxu0 %v382
        %446 = vmatprep.subr.bf16.mxu0 %v381
        %447 = vmatpush1.bf16.msra.mxu0 %v380
        %448 = vmatprep.subr.bf16.mxu0 %v379
        %449 = vmatpush1.bf16.msra.mxu0 %v378
        %450 = vmatprep.subr.bf16.mxu0 %v377
        %451 = vmatpush1.bf16.msra.mxu0 %v376
        %452 = vmatprep.subr.bf16.mxu0 %v375
        %453 = vmatpush1.bf16.msra.mxu0 %v374
        %454 = vmatprep.subr.bf16.mxu0 %v405
        %455 = vmatpush2.bf16.msra.mxu0 %v404
        %456 = vmatprep.subr.bf16.mxu0 %v403
        %457 = vmatpush2.bf16.msra.mxu0 %v402
        %458 = vmatprep.subr.bf16.mxu0 %v401
        %459 = vmatpush2.bf16.msra.mxu0 %v400
        %460 = vmatprep.subr.bf16.mxu0 %v399
        %461 = vmatpush2.bf16.msra.mxu0 %v398
        %462 = vmatprep.subr.bf16.mxu0 %v397
        %463 = vmatpush2.bf16.msra.mxu0 %v396
        %464 = vmatprep.subr.bf16.mxu0 %v395
        %465 = vmatpush2.bf16.msra.mxu0 %v394
        %466 = vmatprep.subr.bf16.mxu0 %v393
        %467 = vmatpush2.bf16.msra.mxu0 %v392
        %468 = vmatprep.subr.bf16.mxu0 %v391
        %469 = vmatpush2.bf16.msra.mxu0 %v390
        %470 = vmatprep.mubr.bf16.mxu0 %v275
        %471 = vmatmul.mubr.bf16.gmra.mxu0 %v274
        %v472 = vpop.f32.mrf.mxu0
        %v473 = vadd.f32 0.0, %v472
        %v474 = vpop.f32.mrf.mxu0
        %v475 = vadd.f32 0.0, %v474
        %v476 = vpop.f32.mrf.mxu0
        %v477 = vadd.f32 0.0, %v476
        %v478 = vpop.f32.mrf.mxu0
        %v479 = vadd.f32 0.0, %v478
        %480 = vdwg.mxu0
        %v481 = vadd.f32 %v230, %v473
        %v482 = vadd.f32 %v231, %v475
        %v483 = vadd.f32 %v232, %v477
        %v484 = vadd.f32 %v233, %v479
        %485 = vst [vmem:[#allocation2] sm:$0xff] %v481
        %486 = vst [vmem:[#allocation2 + $0x8] sm:$0xff] %v482
        %487 = vst [vmem:[#allocation2 + $0x10] sm:$0xff] %v483
        %488 = vst [vmem:[#allocation2 + $0x18] sm:$0xff] %v484
        // Predicated region
        $region41: #{tpu_custom_call.1} parent=27 // pred_check
          %p489 = pneg %p222
        $region42: #{tpu_custom_call.1} parent=27 // pred_check_branch
          %491 = sbr.rel (%p489) target = $region44
        $region43: #{tpu_custom_call.1} parent=27 // pred_region
          %v492 = vld [vmem:[#allocation2] sm:$0xff]
          %v493 = vld [vmem:[#allocation2 + $0x8] sm:$0xff]
          %v494 = vld [vmem:[#allocation2 + $0x10] sm:$0xff]
          %v495 = vld [vmem:[#allocation2 + $0x18] sm:$0xff]
          %v496 = vpack.c.bf16 %v494, %v492
          %v497 = vpack.c.bf16 %v495, %v493
          %v500 = vunpack.c.l.b16 %v496
          %v501 = vunpack.c.l.b16 %v497
          %v502 = vunpack.c.h.b16 %v496
          %v503 = vunpack.c.h.b16 %v497
          %v504 = vpack.c.b16 %v501, %v500
          %v505 = vpack.c.b16 %v503, %v502
          %508 = vst [vmem:[%s215] sm:$0xff] %v504
          %509 = vst [vmem:[%s215 + $0x8] sm:$0xff] %v505
        $region44: #{tpu_custom_call.1} parent=27 // pred_fallthru
          _
        %s510 = sand.u32 %s105, 1
        %s511 = scalar_lea.sflag [#allocation5], %s510
        %s512 = sand.u32 %s105, 1
        %s513 = smul.addr %s512, 16
        %s514 = scalar_lea.vmem [#allocation8], %s513
        // Predicated region
        $region45: #{tpu_custom_call.1} parent=27 // pred_check
          %p515 = pneg %p115
        $region46: #{tpu_custom_call.1} parent=27 // pred_check_branch
          %517 = sbr.rel (%p515) target = $region48
        $region47: #{tpu_custom_call.1} parent=27 // pred_region
          %s518 = smul.u32 2, %s25
          %s519 = smul.u32 2, %s26
          %s521 = ssub.s32 256, 256
          %522 = vsyncadd %s511, %s521
          %s523 = smul.addr %s518, 6
          %s524 = sadd.s32 %s519, %s523
          %s525 = smul.addr %s524, 64
          %s526 = scalar_lea.hbm %s2, %s525
          %s527 = sshll.u32 %s514, 4
          %s528 = int_to_ptr.vmem [resolvable:$true] %s527
          %533 = dma.vmem_to_hbm [thread:$0]  %s528, 256, %s526, %s511, 128, 384, 8
        $region48: #{tpu_custom_call.1} parent=27 // pred_fallthru
          _
      $region28: #{tpu_custom_call.1} parent=5 // pred_fallthru
        _
      %p534 = scmp.le.s32.totalorder 2, %s15
      // Predicated region
      $region49: #{tpu_custom_call.1} parent=5 // pred_check
        %p535 = pneg %p534
      $region50: #{tpu_custom_call.1} parent=5 // pred_check_branch
        %537 = sbr.rel (%p535) target = $region52
      $region51: #{tpu_custom_call.1} parent=5 // pred_region
        %s538 = ssub.s32 %s15, 2
        // Predicated region
        $region53: #{tpu_custom_call.1} parent=51 // pred_check
          %p539 = pneg %p121
        $region54: #{tpu_custom_call.1} parent=51 // pred_check_branch
          %541 = sbr.rel (%p539) target = $region56
        $region55: #{tpu_custom_call.1} parent=51 // pred_region
          %s542 = sand.u32 %s106, 1
          %s543 = scalar_lea.sflag [#allocation5], %s542
          %s544 = sand.u32 %s106, 1
          %s545 = smul.addr %s544, 16
          %s546 = scalar_lea.vmem [#allocation8], %s545
          %547 = dma.done %s543, 256
        $region56: #{tpu_custom_call.1} parent=51 // pred_fallthru
          _
      $region52: #{tpu_custom_call.1} parent=5 // pred_fallthru
        _
    $region6: #{tpu_custom_call.1} parent=1 // loop_footer
      %s19 = sadd.s32 1, %s15
    $region7: #{tpu_custom_call.1} parent=1 // loop_footer_branch
      %14 = sbr.rel target = $region3
    $region8: #{tpu_custom_call.1} parent=1 // loop_exit
      _
    %548 = vsyncpa [#allocation4], 1
    %s549 = scalar_lea.sflag [#allocation4], 1
    %550 = vsyncpa %s549, 1
    %551 = vsyncpa [#allocation7], 1
    %s552 = scalar_lea.sflag [#allocation7], 1
    %553 = vsyncpa %s552, 1
    %554 = vsyncpa [#allocation5], 1
    %s555 = scalar_lea.sflag [#allocation5], 1
    %556 = vsyncpa %s555, 1

</llo_original>
